<compile_context>
chip_gen: v7x
topology: tpu7x:2x2x1
jax: 0.10.0
libtpu: 0.0.40
codegen_flags: <defaults>
</compile_context>

<pallas_src>
import jax
import jax.numpy as jnp
from jax.experimental import pallas as pl
from jax.experimental.pallas import tpu as pltpu

_TM_MAX = 1024     # max rows per grid step (512-1024 ~ 85% of HBM roofline)
_TM_ALIGN = 256    # large-M tiles are multiples of this


def _round_up(x, m):
    return ((x + m - 1) // m) * m


def _choose_tm(m):
    """One tile for small (decode) batches; otherwise big tiles but always
    >= 2 grid steps so v7x's two TensorCores both get work."""
    m8 = _round_up(max(m, 8), 8)
    if m8 <= 2 * _TM_ALIGN:
        return m8
    return min(_TM_MAX, _round_up(pl.cdiv(m8, 2), _TM_ALIGN))


def _fwconv_kernel(state_ref, x_ref, wcs_ref, wcx_ref, wg_ref, out_ref):
    """h = tanh(state@Wc_s + x@Wc_x); out = h * sigmoid(h@Wg).  All f32 math."""
    wcs = wcs_ref[...].astype(jnp.float32)
    wcx = wcx_ref[...].astype(jnp.float32)
    wg = wg_ref[...].astype(jnp.float32)
    h = jnp.tanh(
        jnp.dot(state_ref[...].astype(jnp.float32), wcs,
                preferred_element_type=jnp.float32)
        + jnp.dot(x_ref[...].astype(jnp.float32), wcx,
                  preferred_element_type=jnp.float32)
    )                                                      # (tm, out_size)
    gate = jax.nn.sigmoid(jnp.dot(h, wg, preferred_element_type=jnp.float32))
    out_ref[...] = (h * gate).astype(out_ref.dtype)


def prepare_fwconv_weights(conv_w, gate_w, in_size, kernel_size,
                           weight_dtype=jnp.bfloat16):
    """One-time weight prep (hoisted out of the hot path).

    conv_w: (out_size, in_size*kernel_size)  -- PyTorch Linear layout, with
            weight_norm already folded into the dense matrix.
    gate_w: (out_size, out_size)
    Returns (Wc_state, Wc_x, Wg): transposed, split at the state/x boundary,
    cast to `weight_dtype` (bf16 halves the weight HBM stream; accumulation is
    f32 in the kernel).  No zero-padding is needed: the kernel output is
    stored unpadded.
    """
    state_size = in_size * (kernel_size - 1)
    wc_t = conv_w.T                                    # (in_size*K, out_size)
    wcs = wc_t[:state_size].astype(weight_dtype)       # (state_size, out_size)
    wcx = wc_t[state_size:].astype(weight_dtype)       # (in_size,    out_size)
    wg = gate_w.T.astype(weight_dtype)                 # (out_size,   out_size)
    return wcs, wcx, wg


def _fwconv_call(state2d, x2d, wcs, wcx, wg, out_dtype):
    """Run the fused kernel on M rows; M is tiled, weights stay VMEM-resident."""
    M, in_size = x2d.shape
    state_size = state2d.shape[1]
    out_size = wg.shape[0]

    tm = _choose_tm(M)
    m_pad = _round_up(M, tm)
    if m_pad != M:
        state2d = jnp.pad(state2d, ((0, m_pad - M), (0, 0)))
        x2d = jnp.pad(x2d, ((0, m_pad - M), (0, 0)))

    act_bytes = jnp.dtype(state2d.dtype).itemsize
    w_bytes = jnp.dtype(wcs.dtype).itemsize
    out_bytes = jnp.dtype(out_dtype).itemsize
    cost = pl.CostEstimate(
        flops=2 * m_pad * out_size * (state_size + in_size + out_size)
              + 3 * m_pad * out_size,
        transcendentals=2 * m_pad * out_size,
        bytes_accessed=m_pad * (state_size + in_size) * act_bytes
                       + (wcs.size + wcx.size + wg.size) * w_bytes
                       + m_pad * out_size * out_bytes,
    )

    out = pl.pallas_call(
        _fwconv_kernel,
        out_shape=jax.ShapeDtypeStruct((m_pad, out_size), out_dtype),
        grid=(m_pad // tm,),
        in_specs=[
            pl.BlockSpec((tm, state_size), lambda i: (i, 0)),
            pl.BlockSpec((tm, in_size), lambda i: (i, 0)),
            # Weights: same block every grid step -> DMA'd once, VMEM-resident.
            pl.BlockSpec((state_size, out_size), lambda i: (0, 0)),
            pl.BlockSpec((in_size, out_size), lambda i: (0, 0)),
            pl.BlockSpec((out_size, out_size), lambda i: (0, 0)),
        ],
        out_specs=pl.BlockSpec((tm, out_size), lambda i: (i, 0)),
        compiler_params=pltpu.CompilerParams(
            # Rows are independent: let v7x's two TensorCores split the M tiles.
            dimension_semantics=("parallel",),
            vmem_limit_bytes=32 * 1024 * 1024,
        ),
        cost_estimate=cost,
    )(state2d, x2d, wcs, wcx, wg)
    return out[:M]


def fwconv_forward(x, state, weights, in_size, out_size):
    """Single FWConv step.  x: (B, in_size), state: (B, in_size*(K-1))."""
    # TODO(synk): for true token-by-token decode, keep the (tiny) weights
    # VMEM-resident across calls (pl.get_global / cross-call futures) instead
    # of re-DMAing them each step; prefer fwconv_sequence whenever T > 1.
    wcs, wcx, wg = weights
    out = _fwconv_call(state, x, wcs, wcx, wg, x.dtype)   # (B, out_size), unpadded

    kernel_size = state.shape[1] // in_size + 1
    if kernel_size == 2:
        new_state = x                                      # alias: no HBM copy
    else:
        new_state = jnp.concatenate([state[:, in_size:], x], axis=-1)
    return out, new_state


def fwconv_sequence(x_seq, state0, weights, in_size, out_size):
    """Fuse T autoregressive FWConv steps (kernel_size==2) into ONE pallas_call.

    x_seq: (B, T, in_size), state0: (B, in_size).  Equivalent to calling
    fwconv_forward T times carrying the state, but the weights are DMA'd once
    and B*T rows fill the MXU/VPU.
    """
    wcs, wcx, wg = weights
    B, T, xin = x_seq.shape
    if xin != in_size or state0.shape[-1] != in_size:
        raise ValueError(
            "fwconv_sequence requires kernel_size == 2 "
            "(state0 width must equal in_size)")
    # state at step t is x_{t-1} (with x_{-1} = state0): one shift for the
    # whole sequence instead of a concat per step.
    # TODO(synk): avoid materializing `prev` entirely by laying the sequence
    # out time-major as a single (T+1)*B-row buffer and reading it twice with
    # a B-row offset (manual DMA); saves one full HBM pass of x_seq.
    prev = jnp.concatenate([state0[:, None, :], x_seq[:, :-1, :]], axis=1)
    out = _fwconv_call(
        prev.reshape(B * T, in_size),
        x_seq.reshape(B * T, in_size),
        wcs, wcx, wg, x_seq.dtype,
    ).reshape(B, T, out_size)
    new_state = x_seq[:, -1, :]                            # alias, no copy
    return out, new_state


def _reference_step(x, state, conv_w, gate_w, in_size):
    xcat = jnp.concatenate([state, x], axis=-1)
    h = jnp.tanh(xcat @ conv_w.T)
    out = h * jax.nn.sigmoid(h @ gate_w.T)
    return out, xcat[:, in_size:]


if __name__ == "__main__":
    B, in_size, out_size, K, T = 16, 32, 32, 2, 64

    key = jax.random.PRNGKey(0)
    k_x, k_s, k_wc, k_wg, k_seq = jax.random.split(key, 5)

    x = jax.random.normal(k_x, (B, in_size), dtype=jnp.float32)
    state = jax.random.normal(k_s, (B, in_size * (K - 1)), dtype=jnp.float32)
    # Deterministic dense weights (weight_norm / orthogonal init folded in).
    conv_w = jax.random.normal(k_wc, (out_size, in_size * K), jnp.float32) / jnp.sqrt(in_size * K)
    gate_w = jax.random.normal(k_wg, (out_size, out_size), jnp.float32) / jnp.sqrt(out_size)

    # One-time weight prep (transpose / split / bf16 cast), outside the hot path.
    weights = prepare_fwconv_weights(conv_w, gate_w, in_size, K)

    # --- single step (decode) ---
    out, new_state = fwconv_forward(x, state, weights, in_size, out_size)
    out, new_state = jax.block_until_ready((out, new_state))
    ref_out, ref_state = _reference_step(x, state, conv_w, gate_w, in_size)
    assert out.shape == (B, out_size)
    assert new_state.shape == (B, in_size * (K - 1))
    # bf16 weight streaming -> ~1e-2-level tolerance vs the f32 reference.
    assert jnp.allclose(out, ref_out, atol=2e-2, rtol=2e-2), \
        float(jnp.max(jnp.abs(out - ref_out)))
    assert jnp.allclose(new_state, ref_state)

    # --- fused T-step sequence path (one pallas_call for all steps) ---
    x_seq = jax.random.normal(k_seq, (B, T, in_size), dtype=jnp.float32)
    seq_out, seq_state = fwconv_sequence(x_seq, state, weights, in_size, out_size)
    seq_out, seq_state = jax.block_until_ready((seq_out, seq_state))

    st = state
    ref_seq = []
    for t in range(T):
        o, st = _reference_step(x_seq[:, t], st, conv_w, gate_w, in_size)
        ref_seq.append(o)
    ref_seq = jnp.stack(ref_seq, axis=1)
    assert seq_out.shape == (B, T, out_size)
    assert jnp.allclose(seq_out, ref_seq, atol=2e-2, rtol=2e-2), \
        float(jnp.max(jnp.abs(seq_out - ref_seq)))
    assert jnp.allclose(seq_state, st)

    print("KERNEL_OK")
</pallas_src>

<mosaic_0001>
module attributes {stable_mosaic.version = 11 : i64} {
  func.func @_fwconv_kernel(%arg0: i32, %arg1: memref<16x32xf32, #tpu.memory_space<vmem>>, %arg2: memref<16x32xf32, #tpu.memory_space<vmem>>, %arg3: memref<32x32xbf16, #tpu.memory_space<vmem>>, %arg4: memref<32x32xbf16, #tpu.memory_space<vmem>>, %arg5: memref<32x32xbf16, #tpu.memory_space<vmem>>, %arg6: memref<16x32xf32, #tpu.memory_space<vmem>>) attributes {dimension_semantics = [#tpu.dimension_semantics<parallel>], iteration_bounds = array<i64: 1>, scalar_prefetch = 0 : i64, scratch_operands = 0 : i64, tpu.core_type = #tpu.core_type<tc>, window_params = [{transform_indices = @transform_0, window_bounds = array<i64: 16, 32>}, {transform_indices = @transform_1, window_bounds = array<i64: 16, 32>}, {pipeline_mode = #tpu.pipeline_mode<synchronous>, transform_indices = @transform_2, window_bounds = array<i64: 32, 32>}, {pipeline_mode = #tpu.pipeline_mode<synchronous>, transform_indices = @transform_3, window_bounds = array<i64: 32, 32>}, {pipeline_mode = #tpu.pipeline_mode<synchronous>, transform_indices = @transform_4, window_bounds = array<i64: 32, 32>}, {transform_indices = @transform_5, window_bounds = array<i64: 16, 32>}]} {
    %c0 = arith.constant 0 : index
    %c0_0 = arith.constant 0 : index
    %0 = vector.load %arg3[%c0, %c0_0] : memref<32x32xbf16, #tpu.memory_space<vmem>>, vector<32x32xbf16>
    %1 = arith.extf %0 : vector<32x32xbf16> to vector<32x32xf32>
    %c0_1 = arith.constant 0 : index
    %c0_2 = arith.constant 0 : index
    %2 = vector.load %arg4[%c0_1, %c0_2] : memref<32x32xbf16, #tpu.memory_space<vmem>>, vector<32x32xbf16>
    %3 = arith.extf %2 : vector<32x32xbf16> to vector<32x32xf32>
    %c0_3 = arith.constant 0 : index
    %c0_4 = arith.constant 0 : index
    %4 = vector.load %arg5[%c0_3, %c0_4] : memref<32x32xbf16, #tpu.memory_space<vmem>>, vector<32x32xbf16>
    %5 = arith.extf %4 : vector<32x32xbf16> to vector<32x32xf32>
    %c0_5 = arith.constant 0 : index
    %c0_6 = arith.constant 0 : index
    %6 = vector.load %arg1[%c0_5, %c0_6] : memref<16x32xf32, #tpu.memory_space<vmem>>, vector<16x32xf32>
    %cst = arith.constant dense<0.000000e+00> : vector<16x32xf32>
    %7 = tpu.matmul %6, %1, %cst {dimension_numbers = #tpu.dot_dimension_numbers<[1], [0], [0], [1], [0, 0, 1, 1], [], []>} : vector<16x32xf32>, vector<32x32xf32>, vector<16x32xf32> -> vector<16x32xf32>
    %c0_7 = arith.constant 0 : index
    %c0_8 = arith.constant 0 : index
    %8 = vector.load %arg2[%c0_7, %c0_8] : memref<16x32xf32, #tpu.memory_space<vmem>>, vector<16x32xf32>
    %cst_9 = arith.constant dense<0.000000e+00> : vector<16x32xf32>
    %9 = tpu.matmul %8, %3, %cst_9 {dimension_numbers = #tpu.dot_dimension_numbers<[1], [0], [0], [1], [0, 0, 1, 1], [], []>} : vector<16x32xf32>, vector<32x32xf32>, vector<16x32xf32> -> vector<16x32xf32>
    %10 = arith.addf %7, %9 : vector<16x32xf32>
    %11 = math.tanh %10 : vector<16x32xf32>
    %cst_10 = arith.constant dense<0.000000e+00> : vector<16x32xf32>
    %12 = tpu.matmul %11, %5, %cst_10 {dimension_numbers = #tpu.dot_dimension_numbers<[1], [0], [0], [1], [0, 0, 1, 1], [], []>} : vector<16x32xf32>, vector<32x32xf32>, vector<16x32xf32> -> vector<16x32xf32>
    %13 = arith.negf %12 : vector<16x32xf32>
    %14 = math.exp %13 : vector<16x32xf32>
    %cst_11 = arith.constant 1.000000e+00 : f32
    %15 = vector.broadcast %cst_11 : f32 to vector<16x32xf32>
    %16 = arith.addf %15, %14 : vector<16x32xf32>
    %17 = arith.divf %15, %16 : vector<16x32xf32>
    %18 = arith.mulf %11, %17 : vector<16x32xf32>
    %c0_12 = arith.constant 0 : index
    %c0_13 = arith.constant 0 : index
    %19 = vector.load %arg6[%c0_12, %c0_13] : memref<16x32xf32, #tpu.memory_space<vmem>>, vector<16x32xf32>
    tpu.vector_store %arg6[%c0_12, %c0_13], %18 {strides = array<i32>} : memref<16x32xf32, #tpu.memory_space<vmem>>, vector<16x32xf32>,
    return
  }
  func.func @transform_0(%arg0: i32) -> (i32, i32) {
    %c0_i32 = arith.constant 0 : i32
    %c0_i32_0 = arith.constant 0 : i32
    return %arg0, %c0_i32 : i32, i32
  }
  func.func @transform_1(%arg0: i32) -> (i32, i32) {
    %c0_i32 = arith.constant 0 : i32
    %c0_i32_0 = arith.constant 0 : i32
    return %arg0, %c0_i32 : i32, i32
  }
  func.func @transform_2(%arg0: i32) -> (i32, i32) {
    %c0_i32 = arith.constant 0 : i32
    %c0_i32_0 = arith.constant 0 : i32
    %c0_i32_1 = arith.constant 0 : i32
    return %c0_i32, %c0_i32_0 : i32, i32
  }
  func.func @transform_3(%arg0: i32) -> (i32, i32) {
    %c0_i32 = arith.constant 0 : i32
    %c0_i32_0 = arith.constant 0 : i32
    %c0_i32_1 = arith.constant 0 : i32
    return %c0_i32, %c0_i32_0 : i32, i32
  }
  func.func @transform_4(%arg0: i32) -> (i32, i32) {
    %c0_i32 = arith.constant 0 : i32
    %c0_i32_0 = arith.constant 0 : i32
    %c0_i32_1 = arith.constant 0 : i32
    return %c0_i32, %c0_i32_0 : i32, i32
  }
  func.func @transform_5(%arg0: i32) -> (i32, i32) {
    %c0_i32 = arith.constant 0 : i32
    %c0_i32_0 = arith.constant 0 : i32
    return %arg0, %c0_i32 : i32, i32
  }
}

</mosaic_0001>

<llo_original>
// kernel: tpu_custom_call.1
$region0: #{tpu_custom_call.1}
  #allocation0 [shape = 'u32[]', space=smem, size = 0x4, offset = 0x4, fixed_abs, tag = 'smem constant byte address 0x4 - core index']
  #allocation1 [shape = 'u32[144,128]{1,0:T(1,128)}', space=vmem, size = 0x12000, scoped, tag = 'internal scratch']
  %s0 = inlined_call_operand.hbm [shape: f32[16,32], index: 0, kind: input, shape index: {}]
  %s1 = inlined_call_operand.hbm [shape: f32[16,32], index: 1, kind: input, shape index: {}]
  %s2 = inlined_call_operand.hbm [shape: bf16[32,32], index: 2, kind: input, shape index: {}]
  %s3 = inlined_call_operand.hbm [shape: bf16[32,32], index: 3, kind: input, shape index: {}]
  %s4 = inlined_call_operand.hbm [shape: bf16[32,32], index: 4, kind: input, shape index: {}]
  %s5 = inlined_call_operand.hbm [shape: f32[16,32], index: 5, kind: output, shape index: {}]
  %s6 = sld [smem:[#allocation0]]
  $region50: #{tpu_custom_call.1} parent=0
    _
  %s8 = ssub.s32 1, %s6
  %s9 = scalar_select 0, %s8, %s6
  $region1: #{tpu_custom_call.1} parent=0
    #allocation2 [shape = 'u8[8192]{0}', space=vmem, size = 0x2000, scoped, tag = 'input window, operand 0, single buffered']
    #allocation3 [shape = 's32[1]{0}', space=sflag, size = 0x4, scoped, tag = 'scoped memory for tpu_custom_call.1']
    #allocation4 [shape = 's32[1]{0}', space=sflag, size = 0x4, scoped, tag = 'scoped memory for tpu_custom_call.1']
    #allocation5 [shape = 'u8[8192]{0}', space=vmem, size = 0x2000, scoped, tag = 'input window, operand 1, single buffered']
    #allocation6 [shape = 's32[1]{0}', space=sflag, size = 0x4, scoped, tag = 'scoped memory for tpu_custom_call.1']
    #allocation7 [shape = 'u8[8192]{0}', space=vmem, size = 0x2000, scoped, tag = 'input window, operand 2, single buffered']
    #allocation8 [shape = 'u8[8192]{0}', space=vmem, size = 0x2000, scoped, tag = 'input window, operand 3, single buffered']
    #allocation9 [shape = 's32[1]{0}', space=sflag, size = 0x4, scoped, tag = 'scoped memory for tpu_custom_call.1']
    #allocation10 [shape = 'u8[8192]{0}', space=vmem, size = 0x2000, scoped, tag = 'input window, operand 4, single buffered']
    #allocation11 [shape = 'u8[8192]{0}', space=vmem, size = 0x2000, scoped, tag = 'output window, operand 0, single buffered']
    %10 = vsyncpa [#allocation3], 0
    %11 = vsyncpa [#allocation6], 0
    %12 = vsyncpa [#allocation9], 0
    %13 = vsyncpa [#allocation4], 0
    // Predicated region
    $region2: #{tpu_custom_call.1} parent=1 // pred_check
      _
    $region3: #{tpu_custom_call.1} parent=1 // pred_check_branch
      %15 = sbr.rel (0) target = $region5
    $region4: #{tpu_custom_call.1} parent=1 // pred_region
      %s17 = ssub.s32 256, 256
      %18 = vsyncadd [#allocation3], %s17
      %s19 = sshll.u32 [#allocation2], 4
      %s20 = int_to_ptr.vmem [resolvable:$true] %s19
      %25 = dma.hbm_to_vmem [thread:$0]  %s0, 256, %s20, [#allocation3], 128, 128, 8
    $region5: #{tpu_custom_call.1} parent=1 // pred_fallthru
      _
    // Predicated region
    $region6: #{tpu_custom_call.1} parent=1 // pred_check
      _
    $region7: #{tpu_custom_call.1} parent=1 // pred_check_branch
      %27 = sbr.rel (0) target = $region9
    $region8: #{tpu_custom_call.1} parent=1 // pred_region
      %s29 = ssub.s32 256, 256
      %30 = vsyncadd [#allocation6], %s29
      %s31 = sshll.u32 [#allocation5], 4
      %s32 = int_to_ptr.vmem [resolvable:$true] %s31
      %37 = dma.hbm_to_vmem [thread:$0]  %s1, 256, %s32, [#allocation6], 128, 128, 8
    $region9: #{tpu_custom_call.1} parent=1 // pred_fallthru
      _
    // Predicated region
    $region10: #{tpu_custom_call.1} parent=1 // pred_check
      _
    $region11: #{tpu_custom_call.1} parent=1 // pred_check_branch
      %39 = sbr.rel (0) target = $region13
    $region12: #{tpu_custom_call.1} parent=1 // pred_region
      %s41 = ssub.s32 256, 256
      %42 = vsyncadd [#allocation6], %s41
      %s43 = sshll.u32 [#allocation7], 4
      %s44 = int_to_ptr.vmem [resolvable:$true] %s43
      %49 = dma.hbm_to_vmem [thread:$0]  %s2, 256, %s44, [#allocation6], 64, 64, 4
    $region13: #{tpu_custom_call.1} parent=1 // pred_fallthru
      _
    // Predicated region
    $region14: #{tpu_custom_call.1} parent=1 // pred_check
      _
    $region15: #{tpu_custom_call.1} parent=1 // pred_check_branch
      %51 = sbr.rel (0) target = $region17
    $region16: #{tpu_custom_call.1} parent=1 // pred_region
      %s53 = ssub.s32 256, 256
      %54 = vsyncadd [#allocation9], %s53
      %s55 = sshll.u32 [#allocation8], 4
      %s56 = int_to_ptr.vmem [resolvable:$true] %s55
      %61 = dma.hbm_to_vmem [thread:$0]  %s3, 256, %s56, [#allocation9], 64, 64, 4
    $region17: #{tpu_custom_call.1} parent=1 // pred_fallthru
      _
    // Predicated region
    $region18: #{tpu_custom_call.1} parent=1 // pred_check
      _
    $region19: #{tpu_custom_call.1} parent=1 // pred_check_branch
      %63 = sbr.rel (0) target = $region21
    $region20: #{tpu_custom_call.1} parent=1 // pred_region
      %s65 = ssub.s32 256, 256
      %66 = vsyncadd [#allocation9], %s65
      %s67 = sshll.u32 [#allocation10], 4
      %s68 = int_to_ptr.vmem [resolvable:$true] %s67
      %73 = dma.hbm_to_vmem [thread:$0]  %s4, 256, %s68, [#allocation9], 64, 64, 4
    $region21: #{tpu_custom_call.1} parent=1 // pred_fallthru
      _
    // Predicated region
    $region22: #{tpu_custom_call.1} parent=1 // pred_check
      _
    $region23: #{tpu_custom_call.1} parent=1 // pred_check_branch
      %75 = sbr.rel (0) target = $region25
    $region24: #{tpu_custom_call.1} parent=1 // pred_region
      %76 = dma.done [#allocation3], 256
    $region25: #{tpu_custom_call.1} parent=1 // pred_fallthru
      _
    // Predicated region
    $region26: #{tpu_custom_call.1} parent=1 // pred_check
      _
    $region27: #{tpu_custom_call.1} parent=1 // pred_check_branch
      %78 = sbr.rel (0) target = $region29
    $region28: #{tpu_custom_call.1} parent=1 // pred_region
      %79 = dma.done [#allocation6], 256
    $region29: #{tpu_custom_call.1} parent=1 // pred_fallthru
      _
    // Predicated region
    $region30: #{tpu_custom_call.1} parent=1 // pred_check
      _
    $region31: #{tpu_custom_call.1} parent=1 // pred_check_branch
      %81 = sbr.rel (0) target = $region33
    $region32: #{tpu_custom_call.1} parent=1 // pred_region
      %82 = dma.done [#allocation6], 256
    $region33: #{tpu_custom_call.1} parent=1 // pred_fallthru
      _
    // Predicated region
    $region34: #{tpu_custom_call.1} parent=1 // pred_check
      _
    $region35: #{tpu_custom_call.1} parent=1 // pred_check_branch
      %84 = sbr.rel (0) target = $region37
    $region36: #{tpu_custom_call.1} parent=1 // pred_region
      %85 = dma.done [#allocation9], 256
    $region37: #{tpu_custom_call.1} parent=1 // pred_fallthru
      _
    // Predicated region
    $region38: #{tpu_custom_call.1} parent=1 // pred_check
      _
    $region39: #{tpu_custom_call.1} parent=1 // pred_check_branch
      %87 = sbr.rel (0) target = $region41
    $region40: #{tpu_custom_call.1} parent=1 // pred_region
      %88 = dma.done [#allocation9], 256
    $region41: #{tpu_custom_call.1} parent=1 // pred_fallthru
      _
    %v89 = vld [vmem:[#allocation7] sm:$0xf]
    %v90 = vld [vmem:[#allocation7 + $0x4] sm:$0xf]
    %v91 = vld [vmem:[#allocation7 + $0x8] sm:$0xf]
    %v92 = vld [vmem:[#allocation7 + $0xc] sm:$0xf]
    %v93 = vunpack.c.l.bf16 %v89
    %v94 = vunpack.c.l.bf16 %v90
    %v95 = vunpack.c.l.bf16 %v91
    %v96 = vunpack.c.l.bf16 %v92
    %v97 = vld [vmem:[#allocation8] sm:$0xf]
    %v98 = vld [vmem:[#allocation8 + $0x4] sm:$0xf]
    %v99 = vld [vmem:[#allocation8 + $0x8] sm:$0xf]
    %v100 = vld [vmem:[#allocation8 + $0xc] sm:$0xf]
    %v101 = vunpack.c.l.bf16 %v97
    %v102 = vunpack.c.l.bf16 %v98
    %v103 = vunpack.c.l.bf16 %v99
    %v104 = vunpack.c.l.bf16 %v100
    %v105 = vld [vmem:[#allocation10] sm:$0xf]
    %v106 = vld [vmem:[#allocation10 + $0x4] sm:$0xf]
    %v107 = vld [vmem:[#allocation10 + $0x8] sm:$0xf]
    %v108 = vld [vmem:[#allocation10 + $0xc] sm:$0xf]
    %v109 = vunpack.c.l.bf16 %v105
    %v110 = vunpack.c.l.bf16 %v106
    %v111 = vunpack.c.l.bf16 %v107
    %v112 = vunpack.c.l.bf16 %v108
    %v113 = vld [vmem:[#allocation2] sm:$0xff]
    %v114 = vld [vmem:[#allocation2 + $0x8] sm:$0xff]
    %v115 = vld [vmem:[#allocation5] sm:$0xff]
    %v116 = vld [vmem:[#allocation5 + $0x8] sm:$0xff]
    %vm117 = vcmask 261120
    %v119 = vsel %vm117, %v115, 0
    %v122 = vsel %vm117, %v116, 0
    %124 = vmatprep.subr.mxu0 0.0
    %125 = vmatpush1.msra.mxu0 %v101
    %126 = vmatprep.subr.mxu0 0.0
    %127 = vmatpush1.msra.mxu0 %v102
    %128 = vmatprep.subr.mxu0 0.0
    %129 = vmatpush1.msra.mxu0 %v103
    %130 = vmatprep.subr.mxu0 0.0
    %131 = vmatpush1.msra.mxu0 %v104
    %132 = vmatprep.subr.mxu0 0.0
    %133 = vmatpush1.msra.mxu0 0.0
    %134 = vmatprep.subr.mxu0 0.0
    %135 = vmatpush1.msra.mxu0 0.0
    %136 = vmatprep.subr.mxu0 0.0
    %137 = vmatpush1.msra.mxu0 0.0
    %138 = vmatprep.subr.mxu0 0.0
    %139 = vmatpush1.msra.mxu0 0.0
    %140 = vmatprep.subr.mxu0 0.0
    %141 = vmatpush1.msra.mxu0 0.0
    %142 = vmatprep.subr.mxu0 0.0
    %143 = vmatpush1.msra.mxu0 0.0
    %144 = vmatprep.subr.mxu0 0.0
    %145 = vmatpush1.msra.mxu0 0.0
    %146 = vmatprep.subr.mxu0 0.0
    %147 = vmatpush1.msra.mxu0 0.0
    %148 = vmatprep.subr.mxu0 0.0
    %149 = vmatpush1.msra.mxu0 0.0
    %150 = vmatprep.subr.mxu0 0.0
    %151 = vmatpush1.msra.mxu0 0.0
    %152 = vmatprep.subr.mxu0 0.0
    %153 = vmatpush1.msra.mxu0 0.0
    %154 = vmatprep.subr.mxu0 0.0
    %155 = vmatpush1.msra.mxu0 0.0
    %156 = vmatprep.subr.mxu0 0.0
    %157 = vmatpush1.msra.mxu0 0.0
    %158 = vmatprep.subr.mxu0 0.0
    %159 = vmatpush1.msra.mxu0 0.0
    %160 = vmatprep.subr.mxu0 0.0
    %161 = vmatpush1.msra.mxu0 0.0
    %162 = vmatprep.subr.mxu0 0.0
    %163 = vmatpush1.msra.mxu0 0.0
    %164 = vmatprep.subr.mxu0 0.0
    %165 = vmatpush1.msra.mxu0 0.0
    %166 = vmatprep.subr.mxu0 0.0
    %167 = vmatpush1.msra.mxu0 0.0
    %168 = vmatprep.subr.mxu0 0.0
    %169 = vmatpush1.msra.mxu0 0.0
    %170 = vmatprep.subr.mxu0 0.0
    %171 = vmatpush1.msra.mxu0 0.0
    %172 = vmatprep.subr.mxu0 0.0
    %173 = vmatpush1.msra.mxu0 0.0
    %174 = vmatprep.subr.mxu0 0.0
    %175 = vmatpush1.msra.mxu0 0.0
    %176 = vmatprep.subr.mxu0 0.0
    %177 = vmatpush1.msra.mxu0 0.0
    %178 = vmatprep.subr.mxu0 0.0
    %179 = vmatpush1.msra.mxu0 0.0
    %180 = vmatprep.subr.mxu0 0.0
    %181 = vmatpush1.msra.mxu0 0.0
    %182 = vmatprep.subr.mxu0 0.0
    %183 = vmatpush1.msra.mxu0 0.0
    %184 = vmatprep.subr.mxu0 0.0
    %185 = vmatpush1.msra.mxu0 0.0
    %186 = vmatprep.subr.mxu0 0.0
    %187 = vmatpush1.msra.mxu0 0.0
    %188 = vmatprep.mubr.f32.mxu0 0.0
    %189 = vmatmul.mubr.f32.gmra.mrb[0].mxu0 %v119
    %v190 = vpop.f32.mrb[0].mxu0
    %v191 = vadd.f32 0.0, %v190
    %v192 = vpop.f32.mrb[0].mxu0
    %193 = vmatprep.mubr.f32.mxu0 0.0
    %194 = vmatmul.mubr.f32.gmra.mrb[0].mxu0 %v122
    %v195 = vpop.f32.mrb[0].mxu0
    %v196 = vadd.f32 0.0, %v195
    %v197 = vpop.f32.mrb[0].mxu0
    %198 = vdwg.mxu0
    %v200 = vsel %vm117, %v113, 0
    %v203 = vsel %vm117, %v114, 0
    %205 = vmatprep.subr.mxu0 0.0
    %206 = vmatpush1.msra.mxu0 %v93
    %207 = vmatprep.subr.mxu0 0.0
    %208 = vmatpush1.msra.mxu0 %v94
    %209 = vmatprep.subr.mxu0 0.0
    %210 = vmatpush1.msra.mxu0 %v95
    %211 = vmatprep.subr.mxu0 0.0
    %212 = vmatpush1.msra.mxu0 %v96
    %213 = vmatprep.subr.mxu0 0.0
    %214 = vmatpush1.msra.mxu0 0.0
    %215 = vmatprep.subr.mxu0 0.0
    %216 = vmatpush1.msra.mxu0 0.0
    %217 = vmatprep.subr.mxu0 0.0
    %218 = vmatpush1.msra.mxu0 0.0
    %219 = vmatprep.subr.mxu0 0.0
    %220 = vmatpush1.msra.mxu0 0.0
    %221 = vmatprep.subr.mxu0 0.0
    %222 = vmatpush1.msra.mxu0 0.0
    %223 = vmatprep.subr.mxu0 0.0
    %224 = vmatpush1.msra.mxu0 0.0
    %225 = vmatprep.subr.mxu0 0.0
    %226 = vmatpush1.msra.mxu0 0.0
    %227 = vmatprep.subr.mxu0 0.0
    %228 = vmatpush1.msra.mxu0 0.0
    %229 = vmatprep.subr.mxu0 0.0
    %230 = vmatpush1.msra.mxu0 0.0
    %231 = vmatprep.subr.mxu0 0.0
    %232 = vmatpush1.msra.mxu0 0.0
    %233 = vmatprep.subr.mxu0 0.0
    %234 = vmatpush1.msra.mxu0 0.0
    %235 = vmatprep.subr.mxu0 0.0
    %236 = vmatpush1.msra.mxu0 0.0
    %237 = vmatprep.subr.mxu0 0.0
    %238 = vmatpush1.msra.mxu0 0.0
    %239 = vmatprep.subr.mxu0 0.0
    %240 = vmatpush1.msra.mxu0 0.0
    %241 = vmatprep.subr.mxu0 0.0
    %242 = vmatpush1.msra.mxu0 0.0
    %243 = vmatprep.subr.mxu0 0.0
    %244 = vmatpush1.msra.mxu0 0.0
    %245 = vmatprep.subr.mxu0 0.0
    %246 = vmatpush1.msra.mxu0 0.0
    %247 = vmatprep.subr.mxu0 0.0
    %248 = vmatpush1.msra.mxu0 0.0
    %249 = vmatprep.subr.mxu0 0.0
    %250 = vmatpush1.msra.mxu0 0.0
    %251 = vmatprep.subr.mxu0 0.0
    %252 = vmatpush1.msra.mxu0 0.0
    %253 = vmatprep.subr.mxu0 0.0
    %254 = vmatpush1.msra.mxu0 0.0
    %255 = vmatprep.subr.mxu0 0.0
    %256 = vmatpush1.msra.mxu0 0.0
    %257 = vmatprep.subr.mxu0 0.0
    %258 = vmatpush1.msra.mxu0 0.0
    %259 = vmatprep.subr.mxu0 0.0
    %260 = vmatpush1.msra.mxu0 0.0
    %261 = vmatprep.subr.mxu0 0.0
    %262 = vmatpush1.msra.mxu0 0.0
    %263 = vmatprep.subr.mxu0 0.0
    %264 = vmatpush1.msra.mxu0 0.0
    %265 = vmatprep.subr.mxu0 0.0
    %266 = vmatpush1.msra.mxu0 0.0
    %267 = vmatprep.subr.mxu0 0.0
    %268 = vmatpush1.msra.mxu0 0.0
    %269 = vmatprep.mubr.f32.mxu0 0.0
    %270 = vmatmul.mubr.f32.gmra.mrb[0].mxu0 %v200
    %v271 = vpop.f32.mrb[0].mxu0
    %v272 = vadd.f32 %v191, %v271
    %v273 = vpop.f32.mrb[0].mxu0
    %274 = vmatprep.mubr.f32.mxu0 0.0
    %275 = vmatmul.mubr.f32.gmra.mrb[0].mxu0 %v203
    %v276 = vpop.f32.mrb[0].mxu0
    %v277 = vadd.f32 %v196, %v276
    %v278 = vpop.f32.mrb[0].mxu0
    %279 = vdwg.mxu0
    %v280 = vtanh.pop %v272
    %v281 = vtanh.pop %v277
    %v283 = vsel %vm117, %v280, 0
    %v286 = vsel %vm117, %v281, 0
    %288 = vmatprep.subr.mxu0 0.0
    %289 = vmatpush1.msra.mxu0 %v109
    %290 = vmatprep.subr.mxu0 0.0
    %291 = vmatpush1.msra.mxu0 %v110
    %292 = vmatprep.subr.mxu0 0.0
    %293 = vmatpush1.msra.mxu0 %v111
    %294 = vmatprep.subr.mxu0 0.0
    %295 = vmatpush1.msra.mxu0 %v112
    %296 = vmatprep.subr.mxu0 0.0
    %297 = vmatpush1.msra.mxu0 0.0
    %298 = vmatprep.subr.mxu0 0.0
    %299 = vmatpush1.msra.mxu0 0.0
    %300 = vmatprep.subr.mxu0 0.0
    %301 = vmatpush1.msra.mxu0 0.0
    %302 = vmatprep.subr.mxu0 0.0
    %303 = vmatpush1.msra.mxu0 0.0
    %304 = vmatprep.subr.mxu0 0.0
    %305 = vmatpush1.msra.mxu0 0.0
    %306 = vmatprep.subr.mxu0 0.0
    %307 = vmatpush1.msra.mxu0 0.0
    %308 = vmatprep.subr.mxu0 0.0
    %309 = vmatpush1.msra.mxu0 0.0
    %310 = vmatprep.subr.mxu0 0.0
    %311 = vmatpush1.msra.mxu0 0.0
    %312 = vmatprep.subr.mxu0 0.0
    %313 = vmatpush1.msra.mxu0 0.0
    %314 = vmatprep.subr.mxu0 0.0
    %315 = vmatpush1.msra.mxu0 0.0
    %316 = vmatprep.subr.mxu0 0.0
    %317 = vmatpush1.msra.mxu0 0.0
    %318 = vmatprep.subr.mxu0 0.0
    %319 = vmatpush1.msra.mxu0 0.0
    %320 = vmatprep.subr.mxu0 0.0
    %321 = vmatpush1.msra.mxu0 0.0
    %322 = vmatprep.subr.mxu0 0.0
    %323 = vmatpush1.msra.mxu0 0.0
    %324 = vmatprep.subr.mxu0 0.0
    %325 = vmatpush1.msra.mxu0 0.0
    %326 = vmatprep.subr.mxu0 0.0
    %327 = vmatpush1.msra.mxu0 0.0
    %328 = vmatprep.subr.mxu0 0.0
    %329 = vmatpush1.msra.mxu0 0.0
    %330 = vmatprep.subr.mxu0 0.0
    %331 = vmatpush1.msra.mxu0 0.0
    %332 = vmatprep.subr.mxu0 0.0
    %333 = vmatpush1.msra.mxu0 0.0
    %334 = vmatprep.subr.mxu0 0.0
    %335 = vmatpush1.msra.mxu0 0.0
    %336 = vmatprep.subr.mxu0 0.0
    %337 = vmatpush1.msra.mxu0 0.0
    %338 = vmatprep.subr.mxu0 0.0
    %339 = vmatpush1.msra.mxu0 0.0
    %340 = vmatprep.subr.mxu0 0.0
    %341 = vmatpush1.msra.mxu0 0.0
    %342 = vmatprep.subr.mxu0 0.0
    %343 = vmatpush1.msra.mxu0 0.0
    %344 = vmatprep.subr.mxu0 0.0
    %345 = vmatpush1.msra.mxu0 0.0
    %346 = vmatprep.subr.mxu0 0.0
    %347 = vmatpush1.msra.mxu0 0.0
    %348 = vmatprep.subr.mxu0 0.0
    %349 = vmatpush1.msra.mxu0 0.0
    %350 = vmatprep.subr.mxu0 0.0
    %351 = vmatpush1.msra.mxu0 0.0
    %352 = vmatprep.mubr.f32.mxu0 0.0
    %353 = vmatmul.mubr.f32.gmra.mrb[0].mxu0 %v283
    %v354 = vpop.f32.mrb[0].mxu0
    %v355 = vadd.f32 0.0, %v354
    %v356 = vpop.f32.mrb[0].mxu0
    %357 = vmatprep.mubr.f32.mxu0 0.0
    %358 = vmatmul.mubr.f32.gmra.mrb[0].mxu0 %v286
    %v359 = vpop.f32.mrb[0].mxu0
    %v360 = vadd.f32 0.0, %v359
    %v361 = vpop.f32.mrb[0].mxu0
    %362 = vdwg.mxu0
    %v363 = vxor.u32 %v355, 2147483648
    %v364 = vxor.u32 %v360, 2147483648
    %v365 = vmul.f32 %v363, 1.442695
    %v366 = vpow.pop %v365
    %v367 = vmul.f32 %v364, 1.442695
    %v368 = vpow.pop %v367
    %v369 = vadd.f32 %v366, 1.0
    %v370 = vadd.f32 %v368, 1.0
    %v371 = vrcp.pop %v369
    %v372 = vmul.f32 1.0, %v371
    %v373 = vrcp.pop %v370
    %v374 = vmul.f32 1.0, %v373
    %v375 = vmul.f32 %v280, %v372
    %v376 = vmul.f32 %v281, %v374
    %377 = vst.msk [vmem:[#allocation11] sm:$0xff] %vm117, %v375
    %378 = vst.msk [vmem:[#allocation11 + $0x8] sm:$0xff] %vm117, %v376
    // Predicated region
    $region42: #{tpu_custom_call.1} parent=1 // pred_check
      _
    $region43: #{tpu_custom_call.1} parent=1 // pred_check_branch
      %380 = sbr.rel (0) target = $region45
    $region44: #{tpu_custom_call.1} parent=1 // pred_region
      %s382 = ssub.s32 256, 256
      %383 = vsyncadd [#allocation4], %s382
      %s384 = sshll.u32 [#allocation11], 4
      %s385 = int_to_ptr.vmem [resolvable:$true] %s384
      %390 = dma.vmem_to_hbm [thread:$0]  %s385, 256, %s5, [#allocation4], 128, 128, 8
    $region45: #{tpu_custom_call.1} parent=1 // pred_fallthru
      _
    // Predicated region
    $region46: #{tpu_custom_call.1} parent=1 // pred_check
      _
    $region47: #{tpu_custom_call.1} parent=1 // pred_check_branch
      %392 = sbr.rel (0) target = $region49
    $region48: #{tpu_custom_call.1} parent=1 // pred_region
      %393 = dma.done [#allocation4], 256
    $region49: #{tpu_custom_call.1} parent=1 // pred_fallthru
      _
    %394 = vsyncpa [#allocation3], 1
    %395 = vsyncpa [#allocation6], 1
    %396 = vsyncpa [#allocation9], 1
    %397 = vsyncpa [#allocation4], 1

</llo_original>
